<compile_context>
chip_gen: v6e
topology: v6e:2x2x1
jax: 0.10.0
libtpu: 0.0.40
codegen_flags: <defaults>
</compile_context>

<pallas_src>
import functools

import jax
import jax.numpy as jnp
from jax.experimental import pallas as pl
from jax.experimental.pallas import tpu as pltpu

EPS = float(jnp.finfo(jnp.float32).eps)  # matches torch nn.RMSNorm(eps=None) for f32


def _round_up(v, m):
    return ((v + m - 1) // m) * m


def _ff_kernel(x_ref, g_ref, w1v_ref, w1g_ref, b1v_ref, b1g_ref, w2_ref, b2_ref,
               o_ref, *, d_actual):
    # ---- RMSNorm (f32 statistics; padded feature lanes are zero so sum == sum over real D) ----
    x = x_ref[...].astype(jnp.float32)
    ms = jnp.sum(x * x, axis=-1, keepdims=True) * (1.0 / d_actual)
    xn = x * jax.lax.rsqrt(ms + EPS) * g_ref[...]
    xn_b = xn.astype(jnp.bfloat16)

    # ---- Linear 1, split into value / gate halves (bf16 MXU inputs, f32 accumulation) ----
    h_v = jnp.dot(xn_b, w1v_ref[...], preferred_element_type=jnp.float32) + b1v_ref[...]
    h_g = jnp.dot(xn_b, w1g_ref[...], preferred_element_type=jnp.float32) + b1g_ref[...]

    # ---- GEGLU as defined by the module: silu(gate) * value ----
    act = (h_g * jax.nn.sigmoid(h_g)) * h_v

    # ---- Linear 2 (lane-dense padded output) ----
    y = jnp.dot(act.astype(jnp.bfloat16), w2_ref[...],
                preferred_element_type=jnp.float32) + b2_ref[...]
    o_ref[...] = y.astype(o_ref.dtype)


def feedforward_pallas(x, gamma, w1, b1, w2, b2, *, tile_m=256):
    """x: (B, N, D). Weights use the y = x @ W + b convention:
       w1: (D, 2*Di), b1: (2*Di,), w2: (Di, D), b2: (D,)."""
    B, N, D = x.shape
    D2 = w1.shape[1]
    Di = w2.shape[0]
    assert D2 == 2 * Di

    R = B * N
    # Lane-dense padded feature sizes (multiples of 128) -> unmasked loads/stores, full MXU lanes.
    Dp = _round_up(D, 128)
    Dip = _round_up(Di, 128)

    # Row tile: keep a multiple of 8; clamp to the (rounded-up) row count so tiny inputs
    # don't blow up into a 256-row tile of padding. Rows are padded so any R works (no assert).
    tm = max(8, min(tile_m, _round_up(R, 8)))
    Rp = _round_up(R, tm)

    f32 = jnp.float32
    x2p = jnp.zeros((Rp, Dp), x.dtype).at[:R, :D].set(x.reshape(R, D))
    g_p = jnp.zeros((1, Dp), f32).at[0, :D].set(gamma.astype(f32))

    # Split W1/b1 into value (first half) / gate (second half) per GEGLU's chunk(2, dim=-1).
    w1v = jnp.zeros((Dp, Dip), f32).at[:D, :Di].set(w1[:, :Di]).astype(jnp.bfloat16)
    w1g = jnp.zeros((Dp, Dip), f32).at[:D, :Di].set(w1[:, Di:]).astype(jnp.bfloat16)
    b1v = jnp.zeros((1, Dip), f32).at[0, :Di].set(b1[:Di].astype(f32))
    b1g = jnp.zeros((1, Dip), f32).at[0, :Di].set(b1[Di:].astype(f32))

    w2p = jnp.zeros((Dip, Dp), f32).at[:Di, :D].set(w2).astype(jnp.bfloat16)
    b2p = jnp.zeros((1, Dp), f32).at[0, :D].set(b2.astype(f32))

    grid = (Rp // tm,)

    # Explicit VMEM budget: double-buffered x/out tiles + (resident) bf16 weights + headroom
    # for the f32 intermediates. Capped at 48 MiB so it stays inside v7x's 64 MiB physical VMEM.
    itemsize_x = jnp.dtype(x.dtype).itemsize
    est = (2 * 2 * tm * Dp * itemsize_x                    # x-in + out tiles, double-buffered
           + 2 * (2 * Dp * Dip + Dip * Dp) * 2             # W1v, W1g, W2 (bf16), double-buffered
           + 2 * (2 * Dip + 2 * Dp) * 4                    # biases + gamma
           + 4 * tm * max(Dip, Dp) * 4)                    # live f32 intermediates headroom
    vmem_limit = int(min(48 * 1024 * 1024, max(32 * 1024 * 1024, 2 * est)))

    kernel = functools.partial(_ff_kernel, d_actual=float(D))

    out = pl.pallas_call(
        kernel,
        out_shape=jax.ShapeDtypeStruct((Rp, Dp), x.dtype),
        grid_spec=pltpu.PrefetchScalarGridSpec(
            num_scalar_prefetch=0,
            grid=grid,
            in_specs=[
                pl.BlockSpec((tm, Dp), lambda i: (i, 0)),     # x rows tile
                pl.BlockSpec((1, Dp), lambda i: (0, 0)),      # rmsnorm gamma (padded)
                pl.BlockSpec((Dp, Dip), lambda i: (0, 0)),    # W1 value half
                pl.BlockSpec((Dp, Dip), lambda i: (0, 0)),    # W1 gate half
                pl.BlockSpec((1, Dip), lambda i: (0, 0)),     # b1 value half
                pl.BlockSpec((1, Dip), lambda i: (0, 0)),     # b1 gate half
                pl.BlockSpec((Dip, Dp), lambda i: (0, 0)),    # W2 (padded cols)
                pl.BlockSpec((1, Dp), lambda i: (0, 0)),      # b2 (padded)
            ],
            out_specs=pl.BlockSpec((tm, Dp), lambda i: (i, 0)),
        ),
        compiler_params=pltpu.CompilerParams(
            dimension_semantics=("parallel",),
            vmem_limit_bytes=vmem_limit),
    )(x2p, g_p, w1v, w1g, b1v, b1g, w2p, b2p)

    return out[:R, :D].reshape(B, N, D)


def feedforward_ref(x, gamma, w1, b1, w2, b2, *, mxu_dtype=jnp.bfloat16):
    """Pure-JAX reference. mxu_dtype=bf16 mirrors the kernel's MXU casting;
       mxu_dtype=f32 gives the full-precision reference."""
    xf = x.astype(jnp.float32)
    ms = jnp.mean(xf * xf, axis=-1, keepdims=True)
    xn = xf * jax.lax.rsqrt(ms + EPS) * gamma
    di = w2.shape[0]
    h_v = jnp.dot(xn.astype(mxu_dtype), w1[:, :di].astype(mxu_dtype),
                  preferred_element_type=jnp.float32) + b1[:di]
    h_g = jnp.dot(xn.astype(mxu_dtype), w1[:, di:].astype(mxu_dtype),
                  preferred_element_type=jnp.float32) + b1[di:]
    act = jax.nn.silu(h_g) * h_v
    return jnp.dot(act.astype(mxu_dtype), w2.astype(mxu_dtype),
                   preferred_element_type=jnp.float32) + b2


if __name__ == "__main__":
    # dim=48, mult=4, scale=2/3 -> dim_inner = int(48*4*2/3) = 128
    B, N, D = 2, 8, 48
    MULT, SCALE = 4, 2.0 / 3.0
    DI = int(D * MULT * SCALE)   # 128

    key = jax.random.PRNGKey(0)
    kx, k1, k2, k3, k4 = jax.random.split(key, 5)

    x = jax.random.normal(kx, (B, N, D), dtype=jnp.float32)

    # Deterministic parameter init (torch-like uniform bounds).
    gamma = jnp.ones((D,), dtype=jnp.float32)                      # nn.RMSNorm weight
    bound1 = 1.0 / (D ** 0.5)
    w1 = jax.random.uniform(k1, (D, 2 * DI), jnp.float32, -bound1, bound1)
    b1 = jax.random.uniform(k2, (2 * DI,), jnp.float32, -bound1, bound1)
    bound2 = 1.0 / (DI ** 0.5)
    w2 = jax.random.uniform(k3, (DI, D), jnp.float32, -bound2, bound2)
    b2 = jax.random.uniform(k4, (D,), jnp.float32, -bound2, bound2)

    out = feedforward_pallas(x, gamma, w1, b1, w2, b2)
    out = jax.block_until_ready(out)
    assert out.shape == (B, N, D)

    # Tight check against a reference that mirrors the kernel's bf16 MXU casting.
    ref_bf16 = feedforward_ref(x, gamma, w1, b1, w2, b2, mxu_dtype=jnp.bfloat16)
    assert jnp.allclose(out, ref_bf16, atol=1e-4, rtol=1e-4), (
        float(jnp.max(jnp.abs(out - ref_bf16))))

    # Loose sanity check against the full-f32 reference (bounds bf16 quantization error).
    ref_f32 = feedforward_ref(x, gamma, w1, b1, w2, b2, mxu_dtype=jnp.float32)
    assert jnp.allclose(out, ref_f32, atol=5e-2, rtol=5e-2), (
        float(jnp.max(jnp.abs(out - ref_f32))))

    print("KERNEL_OK")
</pallas_src>

<mosaic_0001>
module attributes {stable_mosaic.version = 11 : i64} {
  func.func @_ff_kernel(%arg0: i32, %arg1: memref<16x128xf32, #tpu.memory_space<vmem>>, %arg2: memref<1x128xf32, #tpu.memory_space<vmem>>, %arg3: memref<128x128xbf16, #tpu.memory_space<vmem>>, %arg4: memref<128x128xbf16, #tpu.memory_space<vmem>>, %arg5: memref<1x128xf32, #tpu.memory_space<vmem>>, %arg6: memref<1x128xf32, #tpu.memory_space<vmem>>, %arg7: memref<128x128xbf16, #tpu.memory_space<vmem>>, %arg8: memref<1x128xf32, #tpu.memory_space<vmem>>, %arg9: memref<16x128xf32, #tpu.memory_space<vmem>>) attributes {dimension_semantics = [#tpu.dimension_semantics<parallel>], iteration_bounds = array<i64: 1>, scalar_prefetch = 0 : i64, scratch_operands = 0 : i64, tpu.core_type = #tpu.core_type<tc>, window_params = [{transform_indices = @transform_0, window_bounds = array<i64: 16, 128>}, {pipeline_mode = #tpu.pipeline_mode<synchronous>, transform_indices = @transform_1, window_bounds = array<i64: 1, 128>}, {pipeline_mode = #tpu.pipeline_mode<synchronous>, transform_indices = @transform_2, window_bounds = array<i64: 128, 128>}, {pipeline_mode = #tpu.pipeline_mode<synchronous>, transform_indices = @transform_3, window_bounds = array<i64: 128, 128>}, {pipeline_mode = #tpu.pipeline_mode<synchronous>, transform_indices = @transform_4, window_bounds = array<i64: 1, 128>}, {pipeline_mode = #tpu.pipeline_mode<synchronous>, transform_indices = @transform_5, window_bounds = array<i64: 1, 128>}, {pipeline_mode = #tpu.pipeline_mode<synchronous>, transform_indices = @transform_6, window_bounds = array<i64: 128, 128>}, {pipeline_mode = #tpu.pipeline_mode<synchronous>, transform_indices = @transform_7, window_bounds = array<i64: 1, 128>}, {transform_indices = @transform_8, window_bounds = array<i64: 16, 128>}]} {
    %c0 = arith.constant 0 : index
    %c0_0 = arith.constant 0 : index
    %0 = vector.load %arg1[%c0, %c0_0] : memref<16x128xf32, #tpu.memory_space<vmem>>, vector<16x128xf32>
    %1 = arith.mulf %0, %0 : vector<16x128xf32>
    %cst = arith.constant dense<0.000000e+00> : vector<16xf32>
    %2 = vector.multi_reduction <add>, %1, %cst [1] : vector<16x128xf32> to vector<16xf32>
    %3 = vector.shape_cast %2 : vector<16xf32> to vector<16x1xf32>
    %cst_1 = arith.constant 0.020833334 : f32
    %4 = vector.broadcast %cst_1 : f32 to vector<16x1xf32>
    %5 = arith.mulf %3, %4 : vector<16x1xf32>
    %cst_2 = arith.constant 1.1920929E-7 : f32
    %6 = vector.broadcast %cst_2 : f32 to vector<16x1xf32>
    %7 = arith.addf %5, %6 : vector<16x1xf32>
    %8 = math.rsqrt %7 : vector<16x1xf32>
    %9 = vector.broadcast %8 : vector<16x1xf32> to vector<16x128xf32>
    %10 = arith.mulf %0, %9 : vector<16x128xf32>
    %c0_3 = arith.constant 0 : index
    %c0_4 = arith.constant 0 : index
    %11 = vector.load %arg2[%c0_3, %c0_4] : memref<1x128xf32, #tpu.memory_space<vmem>>, vector<1x128xf32>
    %12 = vector.broadcast %11 : vector<1x128xf32> to vector<16x128xf32>
    %13 = arith.mulf %10, %12 : vector<16x128xf32>
    %14 = arith.truncf %13 : vector<16x128xf32> to vector<16x128xbf16>
    %c0_5 = arith.constant 0 : index
    %c0_6 = arith.constant 0 : index
    %15 = vector.load %arg3[%c0_5, %c0_6] : memref<128x128xbf16, #tpu.memory_space<vmem>>, vector<128x128xbf16>
    %cst_7 = arith.constant dense<0.000000e+00> : vector<16x128xf32>
    %16 = tpu.matmul %14, %15, %cst_7 {dimension_numbers = #tpu.dot_dimension_numbers<[1], [0], [0], [1], [0, 0, 1, 1], [], []>} : vector<16x128xbf16>, vector<128x128xbf16>, vector<16x128xf32> -> vector<16x128xf32>
    %c0_8 = arith.constant 0 : index
    %c0_9 = arith.constant 0 : index
    %17 = vector.load %arg5[%c0_8, %c0_9] : memref<1x128xf32, #tpu.memory_space<vmem>>, vector<1x128xf32>
    %18 = vector.broadcast %17 : vector<1x128xf32> to vector<16x128xf32>
    %19 = arith.addf %16, %18 : vector<16x128xf32>
    %c0_10 = arith.constant 0 : index
    %c0_11 = arith.constant 0 : index
    %20 = vector.load %arg4[%c0_10, %c0_11] : memref<128x128xbf16, #tpu.memory_space<vmem>>, vector<128x128xbf16>
    %cst_12 = arith.constant dense<0.000000e+00> : vector<16x128xf32>
    %21 = tpu.matmul %14, %20, %cst_12 {dimension_numbers = #tpu.dot_dimension_numbers<[1], [0], [0], [1], [0, 0, 1, 1], [], []>} : vector<16x128xbf16>, vector<128x128xbf16>, vector<16x128xf32> -> vector<16x128xf32>
    %c0_13 = arith.constant 0 : index
    %c0_14 = arith.constant 0 : index
    %22 = vector.load %arg6[%c0_13, %c0_14] : memref<1x128xf32, #tpu.memory_space<vmem>>, vector<1x128xf32>
    %23 = vector.broadcast %22 : vector<1x128xf32> to vector<16x128xf32>
    %24 = arith.addf %21, %23 : vector<16x128xf32>
    %25 = arith.negf %24 : vector<16x128xf32>
    %26 = math.exp %25 : vector<16x128xf32>
    %cst_15 = arith.constant 1.000000e+00 : f32
    %27 = vector.broadcast %cst_15 : f32 to vector<16x128xf32>
    %28 = arith.addf %27, %26 : vector<16x128xf32>
    %29 = arith.divf %27, %28 : vector<16x128xf32>
    %30 = arith.mulf %24, %29 : vector<16x128xf32>
    %31 = arith.mulf %30, %19 : vector<16x128xf32>
    %32 = arith.truncf %31 : vector<16x128xf32> to vector<16x128xbf16>
    %c0_16 = arith.constant 0 : index
    %c0_17 = arith.constant 0 : index
    %33 = vector.load %arg7[%c0_16, %c0_17] : memref<128x128xbf16, #tpu.memory_space<vmem>>, vector<128x128xbf16>
    %cst_18 = arith.constant dense<0.000000e+00> : vector<16x128xf32>
    %34 = tpu.matmul %32, %33, %cst_18 {dimension_numbers = #tpu.dot_dimension_numbers<[1], [0], [0], [1], [0, 0, 1, 1], [], []>} : vector<16x128xbf16>, vector<128x128xbf16>, vector<16x128xf32> -> vector<16x128xf32>
    %c0_19 = arith.constant 0 : index
    %c0_20 = arith.constant 0 : index
    %35 = vector.load %arg8[%c0_19, %c0_20] : memref<1x128xf32, #tpu.memory_space<vmem>>, vector<1x128xf32>
    %36 = vector.broadcast %35 : vector<1x128xf32> to vector<16x128xf32>
    %37 = arith.addf %34, %36 : vector<16x128xf32>
    %c0_21 = arith.constant 0 : index
    %c0_22 = arith.constant 0 : index
    %38 = vector.load %arg9[%c0_21, %c0_22] : memref<16x128xf32, #tpu.memory_space<vmem>>, vector<16x128xf32>
    tpu.vector_store %arg9[%c0_21, %c0_22], %37 {strides = array<i32>} : memref<16x128xf32, #tpu.memory_space<vmem>>, vector<16x128xf32>,
    return
  }
  func.func @transform_0(%arg0: i32) -> (i32, i32) {
    %c0_i32 = arith.constant 0 : i32
    %c0_i32_0 = arith.constant 0 : i32
    return %arg0, %c0_i32 : i32, i32
  }
  func.func @transform_1(%arg0: i32) -> (i32, i32) {
    %c0_i32 = arith.constant 0 : i32
    %c0_i32_0 = arith.constant 0 : i32
    %c0_i32_1 = arith.constant 0 : i32
    return %c0_i32, %c0_i32_0 : i32, i32
  }
  func.func @transform_2(%arg0: i32) -> (i32, i32) {
    %c0_i32 = arith.constant 0 : i32
    %c0_i32_0 = arith.constant 0 : i32
    %c0_i32_1 = arith.constant 0 : i32
    return %c0_i32, %c0_i32_0 : i32, i32
  }
  func.func @transform_3(%arg0: i32) -> (i32, i32) {
    %c0_i32 = arith.constant 0 : i32
    %c0_i32_0 = arith.constant 0 : i32
    %c0_i32_1 = arith.constant 0 : i32
    return %c0_i32, %c0_i32_0 : i32, i32
  }
  func.func @transform_4(%arg0: i32) -> (i32, i32) {
    %c0_i32 = arith.constant 0 : i32
    %c0_i32_0 = arith.constant 0 : i32
    %c0_i32_1 = arith.constant 0 : i32
    return %c0_i32, %c0_i32_0 : i32, i32
  }
  func.func @transform_5(%arg0: i32) -> (i32, i32) {
    %c0_i32 = arith.constant 0 : i32
    %c0_i32_0 = arith.constant 0 : i32
    %c0_i32_1 = arith.constant 0 : i32
    return %c0_i32, %c0_i32_0 : i32, i32
  }
  func.func @transform_6(%arg0: i32) -> (i32, i32) {
    %c0_i32 = arith.constant 0 : i32
    %c0_i32_0 = arith.constant 0 : i32
    %c0_i32_1 = arith.constant 0 : i32
    return %c0_i32, %c0_i32_0 : i32, i32
  }
  func.func @transform_7(%arg0: i32) -> (i32, i32) {
    %c0_i32 = arith.constant 0 : i32
    %c0_i32_0 = arith.constant 0 : i32
    %c0_i32_1 = arith.constant 0 : i32
    return %c0_i32, %c0_i32_0 : i32, i32
  }
  func.func @transform_8(%arg0: i32) -> (i32, i32) {
    %c0_i32 = arith.constant 0 : i32
    %c0_i32_0 = arith.constant 0 : i32
    return %arg0, %c0_i32 : i32, i32
  }
}

</mosaic_0001>

<llo_original>
// kernel: tpu_custom_call.1
$region0: #{tpu_custom_call.1}
  #allocation0 [shape = 'u32[]', space=smem, size = 0x4, offset = 0x4, fixed_abs, tag = 'smem constant byte address 0x4 - core index']
  #allocation1 [shape = 'u32[144,128]{1,0:T(1,128)}', space=vmem, size = 0x12000, scoped, tag = 'internal scratch']
  %s0 = inlined_call_operand.hbm [shape: f32[16,128], index: 0, kind: input, shape index: {}]
  %s1 = inlined_call_operand.vmem [shape: f32[1,128], index: 1, kind: input, shape index: {}]
  %s2 = inlined_call_operand.hbm [shape: bf16[128,128], index: 2, kind: input, shape index: {}]
  %s3 = inlined_call_operand.hbm [shape: bf16[128,128], index: 3, kind: input, shape index: {}]
  %s4 = inlined_call_operand.vmem [shape: f32[1,128], index: 4, kind: input, shape index: {}]
  %s5 = inlined_call_operand.vmem [shape: f32[1,128], index: 5, kind: input, shape index: {}]
  %s6 = inlined_call_operand.hbm [shape: bf16[128,128], index: 6, kind: input, shape index: {}]
  %s7 = inlined_call_operand.vmem [shape: f32[1,128], index: 7, kind: input, shape index: {}]
  %s8 = inlined_call_operand.hbm [shape: f32[16,128], index: 8, kind: output, shape index: {}]
  %s9 = sld [smem:[#allocation0]]
  $region58: #{tpu_custom_call.1} parent=0
    _
  %s11 = ssub.s32 1, %s9
  %s12 = scalar_select 0, %s11, %s9
  $region1: #{tpu_custom_call.1} parent=0
    #allocation2 [shape = 'u8[8192]{0}', space=vmem, size = 0x2000, scoped, tag = 'input window, operand 0, single buffered']
    #allocation3 [shape = 's32[1]{0}', space=sflag, size = 0x4, scoped, tag = 'scoped memory for tpu_custom_call.1']
    #allocation4 [shape = 's32[1]{0}', space=sflag, size = 0x4, scoped, tag = 'scoped memory for tpu_custom_call.1']
    #allocation5 [shape = 'u8[32768]{0}', space=vmem, size = 0x8000, scoped, tag = 'input window, operand 2, single buffered']
    #allocation6 [shape = 's32[1]{0}', space=sflag, size = 0x4, scoped, tag = 'scoped memory for tpu_custom_call.1']
    #allocation7 [shape = 'u8[32768]{0}', space=vmem, size = 0x8000, scoped, tag = 'input window, operand 3, single buffered']
    #allocation8 [shape = 'u8[32768]{0}', space=vmem, size = 0x8000, scoped, tag = 'input window, operand 6, single buffered']
    #allocation9 [shape = 's32[1]{0}', space=sflag, size = 0x4, scoped, tag = 'scoped memory for tpu_custom_call.1']
    #allocation10 [shape = 'u8[8192]{0}', space=vmem, size = 0x2000, scoped, tag = 'output window, operand 0, single buffered']
    %13 = vsyncpa [#allocation3], 0
    %14 = vsyncpa [#allocation6], 0
    %15 = vsyncpa [#allocation9], 0
    %16 = vsyncpa [#allocation4], 0
    // Predicated region
    $region2: #{tpu_custom_call.1} parent=1 // pred_check
      _
    $region3: #{tpu_custom_call.1} parent=1 // pred_check_branch
      %18 = sbr.rel (0) target = $region5
    $region4: #{tpu_custom_call.1} parent=1 // pred_region
      %s20 = ssub.s32 256, 256
      %21 = vsyncadd [#allocation3], %s20
      %s22 = sshll.u32 [#allocation2], 4
      %s23 = int_to_ptr.vmem [resolvable:$true] %s22
      %28 = dma.hbm_to_vmem [thread:$0]  %s0, 256, %s23, [#allocation3], 128, 128, 8
    $region5: #{tpu_custom_call.1} parent=1 // pred_fallthru
      _
    // Predicated region
    $region6: #{tpu_custom_call.1} parent=1 // pred_check
      _
    $region7: #{tpu_custom_call.1} parent=1 // pred_check_branch
      %30 = sbr.rel (0) target = $region9
    $region8: #{tpu_custom_call.1} parent=1 // pred_region
      _
    $region9: #{tpu_custom_call.1} parent=1 // pred_fallthru
      _
    // Predicated region
    $region10: #{tpu_custom_call.1} parent=1 // pred_check
      _
    $region11: #{tpu_custom_call.1} parent=1 // pred_check_branch
      %32 = sbr.rel (0) target = $region13
    $region12: #{tpu_custom_call.1} parent=1 // pred_region
      %s34 = ssub.s32 1024, 1024
      %35 = vsyncadd [#allocation6], %s34
      %s36 = sshll.u32 [#allocation5], 4
      %s37 = int_to_ptr.vmem [resolvable:$true] %s36
      %42 = dma.hbm_to_vmem [thread:$0]  %s2, 1024, %s37, [#allocation6], 64, 64, 4
    $region13: #{tpu_custom_call.1} parent=1 // pred_fallthru
      _
    // Predicated region
    $region14: #{tpu_custom_call.1} parent=1 // pred_check
      _
    $region15: #{tpu_custom_call.1} parent=1 // pred_check_branch
      %44 = sbr.rel (0) target = $region17
    $region16: #{tpu_custom_call.1} parent=1 // pred_region
      %s46 = ssub.s32 1024, 1024
      %47 = vsyncadd [#allocation6], %s46
      %s48 = sshll.u32 [#allocation7], 4
      %s49 = int_to_ptr.vmem [resolvable:$true] %s48
      %54 = dma.hbm_to_vmem [thread:$0]  %s3, 1024, %s49, [#allocation6], 64, 64, 4
    $region17: #{tpu_custom_call.1} parent=1 // pred_fallthru
      _
    // Predicated region
    $region18: #{tpu_custom_call.1} parent=1 // pred_check
      _
    $region19: #{tpu_custom_call.1} parent=1 // pred_check_branch
      %56 = sbr.rel (0) target = $region21
    $region20: #{tpu_custom_call.1} parent=1 // pred_region
      _
    $region21: #{tpu_custom_call.1} parent=1 // pred_fallthru
      _
    // Predicated region
    $region22: #{tpu_custom_call.1} parent=1 // pred_check
      _
    $region23: #{tpu_custom_call.1} parent=1 // pred_check_branch
      %58 = sbr.rel (0) target = $region25
    $region24: #{tpu_custom_call.1} parent=1 // pred_region
      _
    $region25: #{tpu_custom_call.1} parent=1 // pred_fallthru
      _
    // Predicated region
    $region26: #{tpu_custom_call.1} parent=1 // pred_check
      _
    $region27: #{tpu_custom_call.1} parent=1 // pred_check_branch
      %60 = sbr.rel (0) target = $region29
    $region28: #{tpu_custom_call.1} parent=1 // pred_region
      %s62 = ssub.s32 1024, 1024
      %63 = vsyncadd [#allocation9], %s62
      %s64 = sshll.u32 [#allocation8], 4
      %s65 = int_to_ptr.vmem [resolvable:$true] %s64
      %70 = dma.hbm_to_vmem [thread:$0]  %s6, 1024, %s65, [#allocation9], 64, 64, 4
    $region29: #{tpu_custom_call.1} parent=1 // pred_fallthru
      _
    // Predicated region
    $region30: #{tpu_custom_call.1} parent=1 // pred_check
      _
    $region31: #{tpu_custom_call.1} parent=1 // pred_check_branch
      %72 = sbr.rel (0) target = $region33
    $region32: #{tpu_custom_call.1} parent=1 // pred_region
      _
    $region33: #{tpu_custom_call.1} parent=1 // pred_fallthru
      _
    // Predicated region
    $region34: #{tpu_custom_call.1} parent=1 // pred_check
      _
    $region35: #{tpu_custom_call.1} parent=1 // pred_check_branch
      %74 = sbr.rel (0) target = $region37
    $region36: #{tpu_custom_call.1} parent=1 // pred_region
      %75 = dma.done [#allocation3], 256
    $region37: #{tpu_custom_call.1} parent=1 // pred_fallthru
      _
    // Predicated region
    $region38: #{tpu_custom_call.1} parent=1 // pred_check
      _
    $region39: #{tpu_custom_call.1} parent=1 // pred_check_branch
      %77 = sbr.rel (0) target = $region41
    $region40: #{tpu_custom_call.1} parent=1 // pred_region
      %78 = dma.done [#allocation6], 1024
    $region41: #{tpu_custom_call.1} parent=1 // pred_fallthru
      _
    // Predicated region
    $region42: #{tpu_custom_call.1} parent=1 // pred_check
      _
    $region43: #{tpu_custom_call.1} parent=1 // pred_check_branch
      %80 = sbr.rel (0) target = $region45
    $region44: #{tpu_custom_call.1} parent=1 // pred_region
      %81 = dma.done [#allocation6], 1024
    $region45: #{tpu_custom_call.1} parent=1 // pred_fallthru
      _
    // Predicated region
    $region46: #{tpu_custom_call.1} parent=1 // pred_check
      _
    $region47: #{tpu_custom_call.1} parent=1 // pred_check_branch
      %83 = sbr.rel (0) target = $region49
    $region48: #{tpu_custom_call.1} parent=1 // pred_region
      %84 = dma.done [#allocation9], 1024
    $region49: #{tpu_custom_call.1} parent=1 // pred_fallthru
      _
    %v86 = vld [vmem:[#allocation2] sm:$0xff]
    %v87 = vld [vmem:[#allocation2 + $0x8] sm:$0xff]
    %v88 = vmul.f32 %v86, %v86
    %v89 = vmul.f32 %v87, %v87
    %90 = vadd.xlane.f32.xlu0 %v88
    %v91 = vpop.xlane.xlu0 %90
    %92 = vadd.xlane.f32.xlu0 %v89
    %v93 = vpop.xlane.xlu0 %92
    %v94 = vmul.f32 %v91, 0.020833334
    %v95 = vmul.f32 %v93, 0.020833334
    %v96 = vadd.f32 %v94, 1.1920929e-07
    %v97 = vadd.f32 %v95, 1.1920929e-07
    %v98 = vrsqrt.pop %v96
    %v99 = vrsqrt.pop %v97
    %v100 = vmul.f32 %v86, %v98
    %v101 = vmul.f32 %v87, %v99
    %v102 = vld [vmem:[%s1] sm:$0x1]
    %v104 = vlaneseq
    %v105 = vshrl.u32 %v104, 7
    %v106 = vsub.s32 0, %v105
    %v107 = vrot.slane %v102, %v106
    %v109 = vmul.f32 %v100, %v107
    %v110 = vmul.f32 %v101, %v107
    %v111 = vpack.c.bf16 %v110, %v109
    %v112 = vld [vmem:[#allocation5] sm:$0xf]
    %v113 = vld [vmem:[#allocation5 + $0x4] sm:$0xf]
    %v114 = vld [vmem:[#allocation5 + $0x8] sm:$0xf]
    %v115 = vld [vmem:[#allocation5 + $0xc] sm:$0xf]
    %v116 = vld [vmem:[#allocation5 + $0x10] sm:$0xf]
    %v117 = vld [vmem:[#allocation5 + $0x14] sm:$0xf]
    %v118 = vld [vmem:[#allocation5 + $0x18] sm:$0xf]
    %v119 = vld [vmem:[#allocation5 + $0x1c] sm:$0xf]
    %v120 = vld [vmem:[#allocation5 + $0x20] sm:$0xf]
    %v121 = vld [vmem:[#allocation5 + $0x24] sm:$0xf]
    %v122 = vld [vmem:[#allocation5 + $0x28] sm:$0xf]
    %v123 = vld [vmem:[#allocation5 + $0x2c] sm:$0xf]
    %v124 = vld [vmem:[#allocation5 + $0x30] sm:$0xf]
    %v125 = vld [vmem:[#allocation5 + $0x34] sm:$0xf]
    %v126 = vld [vmem:[#allocation5 + $0x38] sm:$0xf]
    %v127 = vld [vmem:[#allocation5 + $0x3c] sm:$0xf]
    %v128 = vld [vmem:[%s4] sm:$0x1]
    %v130 = vlaneseq
    %v131 = vshrl.u32 %v130, 7
    %v132 = vsub.s32 0, %v131
    %v133 = vrot.slane %v128, %v132
    %v151 = vunpack.c.l.b16 %v112
    %v152 = vunpack.c.l.b16 %v113
    %v153 = vunpack.c.l.b16 %v114
    %v154 = vunpack.c.l.b16 %v115
    %v155 = vunpack.c.l.b16 %v116
    %v156 = vunpack.c.l.b16 %v117
    %v157 = vunpack.c.l.b16 %v118
    %v158 = vunpack.c.l.b16 %v119
    %v159 = vunpack.c.l.b16 %v120
    %v160 = vunpack.c.l.b16 %v121
    %v161 = vunpack.c.l.b16 %v122
    %v162 = vunpack.c.l.b16 %v123
    %v163 = vunpack.c.l.b16 %v124
    %v164 = vunpack.c.l.b16 %v125
    %v165 = vunpack.c.l.b16 %v126
    %v166 = vunpack.c.l.b16 %v127
    %v167 = vpack.c.b16 %v152, %v151
    %v168 = vpack.c.b16 %v154, %v153
    %v169 = vpack.c.b16 %v156, %v155
    %v170 = vpack.c.b16 %v158, %v157
    %v171 = vpack.c.b16 %v160, %v159
    %v172 = vpack.c.b16 %v162, %v161
    %v173 = vpack.c.b16 %v164, %v163
    %v174 = vpack.c.b16 %v166, %v165
    %183 = vmatprep.subr.bf16.mxu0 0
    %184 = vmatpush1.bf16.msra.mxu0 %v174
    %185 = vmatprep.subr.bf16.mxu0 0
    %186 = vmatpush1.bf16.msra.mxu0 %v173
    %187 = vmatprep.subr.bf16.mxu0 0
    %188 = vmatpush1.bf16.msra.mxu0 %v172
    %189 = vmatprep.subr.bf16.mxu0 0
    %190 = vmatpush1.bf16.msra.mxu0 %v171
    %191 = vmatprep.subr.bf16.mxu0 0
    %192 = vmatpush1.bf16.msra.mxu0 %v170
    %193 = vmatprep.subr.bf16.mxu0 0
    %194 = vmatpush1.bf16.msra.mxu0 %v169
    %195 = vmatprep.subr.bf16.mxu0 0
    %196 = vmatpush1.bf16.msra.mxu0 %v168
    %197 = vmatprep.subr.bf16.mxu0 0
    %198 = vmatpush1.bf16.msra.mxu0 %v167
    %199 = vmatprep.subr.bf16.mxu0 0
    %200 = vmatpush2.bf16.msra.mxu0 0
    %201 = vmatprep.subr.bf16.mxu0 0
    %202 = vmatpush2.bf16.msra.mxu0 0
    %203 = vmatprep.subr.bf16.mxu0 0
    %204 = vmatpush2.bf16.msra.mxu0 0
    %205 = vmatprep.subr.bf16.mxu0 0
    %206 = vmatpush2.bf16.msra.mxu0 0
    %207 = vmatprep.subr.bf16.mxu0 0
    %208 = vmatpush2.bf16.msra.mxu0 0
    %209 = vmatprep.subr.bf16.mxu0 0
    %210 = vmatpush2.bf16.msra.mxu0 0
    %211 = vmatprep.subr.bf16.mxu0 0
    %212 = vmatpush2.bf16.msra.mxu0 0
    %213 = vmatprep.subr.bf16.mxu0 0
    %214 = vmatpush2.bf16.msra.mxu0 0
    %215 = vmatprep.mubr.bf16.mxu0 0
    %216 = vmatmul.mubr.bf16.gmra.mxu0 %v111
    %v217 = vpop.f32.mrf.mxu0
    %v218 = vadd.f32 %v133, %v217
    %v219 = vpop.f32.mrf.mxu0
    %v220 = vpop.f32.mrf.mxu0
    %v221 = vadd.f32 %v133, %v220
    %v222 = vpop.f32.mrf.mxu0
    %223 = vdwg.mxu0
    %v224 = vld [vmem:[#allocation7] sm:$0xf]
    %v225 = vld [vmem:[#allocation7 + $0x4] sm:$0xf]
    %v226 = vld [vmem:[#allocation7 + $0x8] sm:$0xf]
    %v227 = vld [vmem:[#allocation7 + $0xc] sm:$0xf]
    %v228 = vld [vmem:[#allocation7 + $0x10] sm:$0xf]
    %v229 = vld [vmem:[#allocation7 + $0x14] sm:$0xf]
    %v230 = vld [vmem:[#allocation7 + $0x18] sm:$0xf]
    %v231 = vld [vmem:[#allocation7 + $0x1c] sm:$0xf]
    %v232 = vld [vmem:[#allocation7 + $0x20] sm:$0xf]
    %v233 = vld [vmem:[#allocation7 + $0x24] sm:$0xf]
    %v234 = vld [vmem:[#allocation7 + $0x28] sm:$0xf]
    %v235 = vld [vmem:[#allocation7 + $0x2c] sm:$0xf]
    %v236 = vld [vmem:[#allocation7 + $0x30] sm:$0xf]
    %v237 = vld [vmem:[#allocation7 + $0x34] sm:$0xf]
    %v238 = vld [vmem:[#allocation7 + $0x38] sm:$0xf]
    %v239 = vld [vmem:[#allocation7 + $0x3c] sm:$0xf]
    %v240 = vld [vmem:[%s5] sm:$0x1]
    %v242 = vlaneseq
    %v243 = vshrl.u32 %v242, 7
    %v244 = vsub.s32 0, %v243
    %v245 = vrot.slane %v240, %v244
    %v263 = vunpack.c.l.b16 %v224
    %v264 = vunpack.c.l.b16 %v225
    %v265 = vunpack.c.l.b16 %v226
    %v266 = vunpack.c.l.b16 %v227
    %v267 = vunpack.c.l.b16 %v228
    %v268 = vunpack.c.l.b16 %v229
    %v269 = vunpack.c.l.b16 %v230
    %v270 = vunpack.c.l.b16 %v231
    %v271 = vunpack.c.l.b16 %v232
    %v272 = vunpack.c.l.b16 %v233
    %v273 = vunpack.c.l.b16 %v234
    %v274 = vunpack.c.l.b16 %v235
    %v275 = vunpack.c.l.b16 %v236
    %v276 = vunpack.c.l.b16 %v237
    %v277 = vunpack.c.l.b16 %v238
    %v278 = vunpack.c.l.b16 %v239
    %v279 = vpack.c.b16 %v264, %v263
    %v280 = vpack.c.b16 %v266, %v265
    %v281 = vpack.c.b16 %v268, %v267
    %v282 = vpack.c.b16 %v270, %v269
    %v283 = vpack.c.b16 %v272, %v271
    %v284 = vpack.c.b16 %v274, %v273
    %v285 = vpack.c.b16 %v276, %v275
    %v286 = vpack.c.b16 %v278, %v277
    %295 = vmatprep.subr.bf16.mxu0 0
    %296 = vmatpush1.bf16.msra.mxu0 %v286
    %297 = vmatprep.subr.bf16.mxu0 0
    %298 = vmatpush1.bf16.msra.mxu0 %v285
    %299 = vmatprep.subr.bf16.mxu0 0
    %300 = vmatpush1.bf16.msra.mxu0 %v284
    %301 = vmatprep.subr.bf16.mxu0 0
    %302 = vmatpush1.bf16.msra.mxu0 %v283
    %303 = vmatprep.subr.bf16.mxu0 0
    %304 = vmatpush1.bf16.msra.mxu0 %v282
    %305 = vmatprep.subr.bf16.mxu0 0
    %306 = vmatpush1.bf16.msra.mxu0 %v281
    %307 = vmatprep.subr.bf16.mxu0 0
    %308 = vmatpush1.bf16.msra.mxu0 %v280
    %309 = vmatprep.subr.bf16.mxu0 0
    %310 = vmatpush1.bf16.msra.mxu0 %v279
    %311 = vmatprep.subr.bf16.mxu0 0
    %312 = vmatpush2.bf16.msra.mxu0 0
    %313 = vmatprep.subr.bf16.mxu0 0
    %314 = vmatpush2.bf16.msra.mxu0 0
    %315 = vmatprep.subr.bf16.mxu0 0
    %316 = vmatpush2.bf16.msra.mxu0 0
    %317 = vmatprep.subr.bf16.mxu0 0
    %318 = vmatpush2.bf16.msra.mxu0 0
    %319 = vmatprep.subr.bf16.mxu0 0
    %320 = vmatpush2.bf16.msra.mxu0 0
    %321 = vmatprep.subr.bf16.mxu0 0
    %322 = vmatpush2.bf16.msra.mxu0 0
    %323 = vmatprep.subr.bf16.mxu0 0
    %324 = vmatpush2.bf16.msra.mxu0 0
    %325 = vmatprep.subr.bf16.mxu0 0
    %326 = vmatpush2.bf16.msra.mxu0 0
    %327 = vmatprep.mubr.bf16.mxu0 0
    %328 = vmatmul.mubr.bf16.gmra.mxu0 %v111
    %v329 = vpop.f32.mrf.mxu0
    %v330 = vadd.f32 %v245, %v329
    %v331 = vpop.f32.mrf.mxu0
    %v332 = vpop.f32.mrf.mxu0
    %v333 = vadd.f32 %v245, %v332
    %v334 = vpop.f32.mrf.mxu0
    %335 = vdwg.mxu0
    %v336 = vxor.u32 %v330, 2147483648
    %v337 = vxor.u32 %v333, 2147483648
    %v338 = vmul.f32 %v336, 1.442695
    %v339 = vpow.pop %v338
    %v340 = vmul.f32 %v337, 1.442695
    %v341 = vpow.pop %v340
    %v342 = vadd.f32 %v339, 1.0
    %v343 = vadd.f32 %v341, 1.0
    %v344 = vrcp.pop %v342
    %v345 = vmul.f32 1.0, %v344
    %v346 = vrcp.pop %v343
    %v347 = vmul.f32 1.0, %v346
    %v348 = vmul.f32 %v330, %v345
    %v349 = vmul.f32 %v333, %v347
    %v350 = vmul.f32 %v348, %v218
    %v351 = vmul.f32 %v349, %v221
    %v352 = vpack.c.bf16 %v351, %v350
    %v353 = vld [vmem:[#allocation8] sm:$0xf]
    %v354 = vld [vmem:[#allocation8 + $0x4] sm:$0xf]
    %v355 = vld [vmem:[#allocation8 + $0x8] sm:$0xf]
    %v356 = vld [vmem:[#allocation8 + $0xc] sm:$0xf]
    %v357 = vld [vmem:[#allocation8 + $0x10] sm:$0xf]
    %v358 = vld [vmem:[#allocation8 + $0x14] sm:$0xf]
    %v359 = vld [vmem:[#allocation8 + $0x18] sm:$0xf]
    %v360 = vld [vmem:[#allocation8 + $0x1c] sm:$0xf]
    %v361 = vld [vmem:[#allocation8 + $0x20] sm:$0xf]
    %v362 = vld [vmem:[#allocation8 + $0x24] sm:$0xf]
    %v363 = vld [vmem:[#allocation8 + $0x28] sm:$0xf]
    %v364 = vld [vmem:[#allocation8 + $0x2c] sm:$0xf]
    %v365 = vld [vmem:[#allocation8 + $0x30] sm:$0xf]
    %v366 = vld [vmem:[#allocation8 + $0x34] sm:$0xf]
    %v367 = vld [vmem:[#allocation8 + $0x38] sm:$0xf]
    %v368 = vld [vmem:[#allocation8 + $0x3c] sm:$0xf]
    %v369 = vld [vmem:[%s7] sm:$0x1]
    %v371 = vlaneseq
    %v372 = vshrl.u32 %v371, 7
    %v373 = vsub.s32 0, %v372
    %v374 = vrot.slane %v369, %v373
    %v392 = vunpack.c.l.b16 %v353
    %v393 = vunpack.c.l.b16 %v354
    %v394 = vunpack.c.l.b16 %v355
    %v395 = vunpack.c.l.b16 %v356
    %v396 = vunpack.c.l.b16 %v357
    %v397 = vunpack.c.l.b16 %v358
    %v398 = vunpack.c.l.b16 %v359
    %v399 = vunpack.c.l.b16 %v360
    %v400 = vunpack.c.l.b16 %v361
    %v401 = vunpack.c.l.b16 %v362
    %v402 = vunpack.c.l.b16 %v363
    %v403 = vunpack.c.l.b16 %v364
    %v404 = vunpack.c.l.b16 %v365
    %v405 = vunpack.c.l.b16 %v366
    %v406 = vunpack.c.l.b16 %v367
    %v407 = vunpack.c.l.b16 %v368
    %v408 = vpack.c.b16 %v393, %v392
    %v409 = vpack.c.b16 %v395, %v394
    %v410 = vpack.c.b16 %v397, %v396
    %v411 = vpack.c.b16 %v399, %v398
    %v412 = vpack.c.b16 %v401, %v400
    %v413 = vpack.c.b16 %v403, %v402
    %v414 = vpack.c.b16 %v405, %v404
    %v415 = vpack.c.b16 %v407, %v406
    %424 = vmatprep.subr.bf16.mxu0 0
    %425 = vmatpush1.bf16.msra.mxu0 %v415
    %426 = vmatprep.subr.bf16.mxu0 0
    %427 = vmatpush1.bf16.msra.mxu0 %v414
    %428 = vmatprep.subr.bf16.mxu0 0
    %429 = vmatpush1.bf16.msra.mxu0 %v413
    %430 = vmatprep.subr.bf16.mxu0 0
    %431 = vmatpush1.bf16.msra.mxu0 %v412
    %432 = vmatprep.subr.bf16.mxu0 0
    %433 = vmatpush1.bf16.msra.mxu0 %v411
    %434 = vmatprep.subr.bf16.mxu0 0
    %435 = vmatpush1.bf16.msra.mxu0 %v410
    %436 = vmatprep.subr.bf16.mxu0 0
    %437 = vmatpush1.bf16.msra.mxu0 %v409
    %438 = vmatprep.subr.bf16.mxu0 0
    %439 = vmatpush1.bf16.msra.mxu0 %v408
    %440 = vmatprep.subr.bf16.mxu0 0
    %441 = vmatpush2.bf16.msra.mxu0 0
    %442 = vmatprep.subr.bf16.mxu0 0
    %443 = vmatpush2.bf16.msra.mxu0 0
    %444 = vmatprep.subr.bf16.mxu0 0
    %445 = vmatpush2.bf16.msra.mxu0 0
    %446 = vmatprep.subr.bf16.mxu0 0
    %447 = vmatpush2.bf16.msra.mxu0 0
    %448 = vmatprep.subr.bf16.mxu0 0
    %449 = vmatpush2.bf16.msra.mxu0 0
    %450 = vmatprep.subr.bf16.mxu0 0
    %451 = vmatpush2.bf16.msra.mxu0 0
    %452 = vmatprep.subr.bf16.mxu0 0
    %453 = vmatpush2.bf16.msra.mxu0 0
    %454 = vmatprep.subr.bf16.mxu0 0
    %455 = vmatpush2.bf16.msra.mxu0 0
    %456 = vmatprep.mubr.bf16.mxu0 0
    %457 = vmatmul.mubr.bf16.gmra.mxu0 %v352
    %v458 = vpop.f32.mrf.mxu0
    %v459 = vadd.f32 %v374, %v458
    %v460 = vpop.f32.mrf.mxu0
    %v461 = vpop.f32.mrf.mxu0
    %v462 = vadd.f32 %v374, %v461
    %v463 = vpop.f32.mrf.mxu0
    %464 = vdwg.mxu0
    %465 = vst [vmem:[#allocation10] sm:$0xff] %v459
    %466 = vst [vmem:[#allocation10 + $0x8] sm:$0xff] %v462
    // Predicated region
    $region50: #{tpu_custom_call.1} parent=1 // pred_check
      _
    $region51: #{tpu_custom_call.1} parent=1 // pred_check_branch
      %468 = sbr.rel (0) target = $region53
    $region52: #{tpu_custom_call.1} parent=1 // pred_region
      %s470 = ssub.s32 256, 256
      %471 = vsyncadd [#allocation4], %s470
      %s472 = sshll.u32 [#allocation10], 4
      %s473 = int_to_ptr.vmem [resolvable:$true] %s472
      %478 = dma.vmem_to_hbm [thread:$0]  %s473, 256, %s8, [#allocation4], 128, 128, 8
    $region53: #{tpu_custom_call.1} parent=1 // pred_fallthru
      _
    // Predicated region
    $region54: #{tpu_custom_call.1} parent=1 // pred_check
      _
    $region55: #{tpu_custom_call.1} parent=1 // pred_check_branch
      %480 = sbr.rel (0) target = $region57
    $region56: #{tpu_custom_call.1} parent=1 // pred_region
      %481 = dma.done [#allocation4], 256
    $region57: #{tpu_custom_call.1} parent=1 // pred_fallthru
      _
    %482 = vsyncpa [#allocation3], 1
    %483 = vsyncpa [#allocation6], 1
    %484 = vsyncpa [#allocation9], 1
    %485 = vsyncpa [#allocation4], 1

</llo_original>
